<compile_context>
chip_gen: v7x
topology: tpu7x:2x2x1
jax: 0.10.0
libtpu: 0.0.40
codegen_flags: <defaults>
</compile_context>

<pallas_src>
import jax
import jax.numpy as jnp
from jax.experimental import pallas as pl
from jax.experimental.pallas import tpu as pltpu

_LANE = 128


def _round_up(x, m):
    return (x + m - 1) // m * m


def _actor_critic_kernel(
    x_ref,
    fw1_ref, fb1_ref, fw2_ref, fb2_ref,      # feature net
    hw1_ref, hb1_ref,                        # fused (actor heads + critic) layer 1
    hw2_ref, hb2_ref,                        # fused block-diagonal layer 2 (+ lane pad)
    segsum_ref, amask_ref,                   # softmax helpers (0/1 matrices)
    out_ref,                                 # (block_b, n_cols_pad) lane-dense slab
):
    f32 = jnp.float32
    x = x_ref[...]

    # ---- feature_net: Linear -> Tanh -> Linear -> Tanh ----
    h = jnp.tanh(jnp.dot(x, fw1_ref[...], preferred_element_type=f32) + fb1_ref[...])
    h = jnp.tanh(jnp.dot(h, fw2_ref[...], preferred_element_type=f32) + fb2_ref[...])

    # ---- all actor-head first layers + critic first layer: ONE matmul + tanh ----
    z = jnp.tanh(jnp.dot(h, hw1_ref[...], preferred_element_type=f32) + hb1_ref[...])

    # ---- all actor-head second layers + critic second layer: ONE block-diag matmul ----
    # slab columns: [head0 logits | head1 logits | ... | value | zero pad]
    slab = jnp.dot(z, hw2_ref[...], preferred_element_type=f32) + hb2_ref[...]

    # ---- segmented softmax over each head's logit columns, fully vectorized ----
    amask = amask_ref[...] != 0.0                        # (1, C) bool, broadcasts over rows
    m = jnp.max(jnp.where(amask, slab, -jnp.inf), axis=-1, keepdims=True)
    e = jnp.where(amask, jnp.exp(slab - m), 0.0)
    # per-segment sums via one tiny (C, C) 0/1 matmul; denominator is shared by
    # every column of a head, so the exact divide guarantees per-head sum == 1.
    seg_sum = jnp.dot(e, segsum_ref[...], preferred_element_type=f32)
    denom = jnp.where(amask, seg_sum, 1.0)
    probs = e / denom

    # single lane-dense store: probs in actor columns, value / zero pad pass through
    out_ref[...] = jnp.where(amask, probs, slab)


def actor_critic_forward(x, params, *, n_agent, output_dim, block_b=None):
    B, input_dim = x.shape
    fw1, fb1, fw2, fb2, aw1, ab1, aw2, ab2, cw1, cb1, cw2, cb2 = params
    hidden_dim = fw1.shape[1]

    # ---- wrapper-side fusion of the per-agent heads + critic (layout plumbing) ----
    hw1 = jnp.concatenate([aw1[a] for a in range(n_agent)] + [cw1], axis=1)   # (H, A*H+H)
    hb1 = jnp.concatenate([ab1[a] for a in range(n_agent)] + [cb1], axis=1)   # (1, A*H+H)
    hw2 = jax.scipy.linalg.block_diag(*[aw2[a] for a in range(n_agent)], cw2)  # (A*H+H, A*O+1)
    hb2 = jnp.concatenate([ab2[a] for a in range(n_agent)] + [cb2], axis=1)   # (1, A*O+1)

    n_actor_cols = n_agent * output_dim
    n_cols = n_actor_cols + 1
    n_cols_pad = _round_up(n_cols, _LANE)
    pad = n_cols_pad - n_cols
    hw2 = jnp.pad(hw2, ((0, 0), (0, pad)))
    hb2 = jnp.pad(hb2, ((0, 0), (0, pad)))

    # segment-sum matrix and actor-column mask (0/1, built once per call)
    col = jnp.arange(n_cols_pad)
    is_actor = col < n_actor_cols
    same_seg = (col[:, None] // output_dim) == (col[None, :] // output_dim)
    seg_mat = (same_seg & is_actor[:, None] & is_actor[None, :]).astype(jnp.float32)
    amask = is_actor.astype(jnp.float32)[None, :]

    # ---- batch tiling: grid over B, weights resident across grid steps ----
    if block_b is None:
        block_b = B
        for cand in (512, 256, 128, 64, 32, 16, 8):
            if B % cand == 0:
                block_b = cand
                break
    assert B % block_b == 0, "batch must be divisible by block_b"
    assert block_b == B or block_b % 8 == 0, "block_b must be a multiple of 8"
    grid = (B // block_b,)

    fused = (fw1, fb1, fw2, fb2, hw1, hb1, hw2, hb2, seg_mat, amask)
    in_specs = [pl.BlockSpec((block_b, input_dim), lambda i: (i, 0))] + [
        pl.BlockSpec(p.shape, lambda i: (0, 0)) for p in fused
    ]
    out_specs = pl.BlockSpec((block_b, n_cols_pad), lambda i: (i, 0))

    wide = n_agent * hidden_dim + hidden_dim
    flops = 2 * B * (
        input_dim * hidden_dim + hidden_dim * hidden_dim
        + hidden_dim * wide + wide * n_cols_pad + n_cols_pad * n_cols_pad
    )
    transcendentals = B * (2 * hidden_dim + wide + 2 * n_cols_pad)
    bytes_accessed = 4 * (B * input_dim + B * n_cols_pad + sum(int(p.size) for p in fused))

    slab = pl.pallas_call(
        _actor_critic_kernel,
        grid=grid,
        in_specs=in_specs,
        out_specs=out_specs,
        out_shape=jax.ShapeDtypeStruct((B, n_cols_pad), jnp.float32),
        compiler_params=pltpu.CompilerParams(dimension_semantics=("parallel",)),
        cost_estimate=pl.CostEstimate(
            flops=flops, transcendentals=transcendentals, bytes_accessed=bytes_accessed
        ),
    )(x, *fused)

    # unpack the lane-dense slab back to the module's output contract
    probs = slab[:, :n_actor_cols].reshape(B, n_agent, output_dim).transpose(1, 0, 2)
    value = slab[:, n_actor_cols:n_actor_cols + 1]
    return probs, value


def init_params(key, input_dim, output_dim, n_agent, hidden_dim):
    """Deterministic synthetic init (uniform, PyTorch-Linear-like bound)."""
    def linear(key, fan_in, fan_out, extra=()):
        kw, kb = jax.random.split(key)
        bound = 1.0 / jnp.sqrt(fan_in)
        w = jax.random.uniform(kw, extra + (fan_in, fan_out), jnp.float32, -bound, bound)
        b = jax.random.uniform(kb, extra + (1, fan_out), jnp.float32, -bound, bound)
        return w, b

    keys = jax.random.split(key, 6)
    fw1, fb1 = linear(keys[0], input_dim, hidden_dim)
    fw2, fb2 = linear(keys[1], hidden_dim, hidden_dim)
    aw1, ab1 = linear(keys[2], hidden_dim, hidden_dim, extra=(n_agent,))
    aw2, ab2 = linear(keys[3], hidden_dim, output_dim, extra=(n_agent,))
    cw1, cb1 = linear(keys[4], hidden_dim, hidden_dim)
    cw2, cb2 = linear(keys[5], hidden_dim, 1)
    return (fw1, fb1, fw2, fb2, aw1, ab1, aw2, ab2, cw1, cb1, cw2, cb2)


def reference_forward(x, params, *, n_agent):
    """Pure-JAX reference mirroring the PyTorch module (unfused)."""
    fw1, fb1, fw2, fb2, aw1, ab1, aw2, ab2, cw1, cb1, cw2, cb2 = params
    h = jnp.tanh(x @ fw1 + fb1)
    h = jnp.tanh(h @ fw2 + fb2)
    probs = []
    for a in range(n_agent):
        z = jnp.tanh(h @ aw1[a] + ab1[a])
        logits = z @ aw2[a] + ab2[a]
        probs.append(jax.nn.softmax(logits, axis=-1))
    value = jnp.tanh(h @ cw1 + cb1) @ cw2 + cb2
    return jnp.stack(probs, axis=0), value


if __name__ == "__main__":
    B, INPUT_DIM, OUTPUT_DIM, N_AGENT, HIDDEN_DIM = 64, 16, 8, 3, 32

    key = jax.random.PRNGKey(0)
    k_x, k_p = jax.random.split(key)
    x = jax.random.normal(k_x, (B, INPUT_DIM), jnp.float32)
    params = init_params(k_p, INPUT_DIM, OUTPUT_DIM, N_AGENT, HIDDEN_DIM)

    probs, value = actor_critic_forward(
        x, params, n_agent=N_AGENT, output_dim=OUTPUT_DIM, block_b=32  # grid of 2 steps
    )
    jax.block_until_ready((probs, value))

    ref_probs, ref_value = reference_forward(x, params, n_agent=N_AGENT)
    assert probs.shape == (N_AGENT, B, OUTPUT_DIM)
    assert value.shape == (B, 1)
    # fused f32 matmuls / hardware tanh -> modest tolerances vs the unfused ref
    assert jnp.allclose(probs, ref_probs, atol=2e-3, rtol=2e-3)
    assert jnp.allclose(value, ref_value, atol=2e-3, rtol=2e-3)
    # each actor head's probabilities sum to 1 (exact divide -> f32 rounding only)
    assert jnp.allclose(jnp.sum(probs, axis=-1), 1.0, atol=1e-3)

    print("KERNEL_OK")
</pallas_src>

<mosaic_0001>
module attributes {stable_mosaic.version = 11 : i64} {
  func.func @_actor_critic_kernel(%arg0: i32, %arg1: memref<32x16xf32, #tpu.memory_space<vmem>>, %arg2: memref<16x32xf32, #tpu.memory_space<vmem>>, %arg3: memref<1x32xf32, #tpu.memory_space<vmem>>, %arg4: memref<32x32xf32, #tpu.memory_space<vmem>>, %arg5: memref<1x32xf32, #tpu.memory_space<vmem>>, %arg6: memref<32x128xf32, #tpu.memory_space<vmem>>, %arg7: memref<1x128xf32, #tpu.memory_space<vmem>>, %arg8: memref<128x128xf32, #tpu.memory_space<vmem>>, %arg9: memref<1x128xf32, #tpu.memory_space<vmem>>, %arg10: memref<128x128xf32, #tpu.memory_space<vmem>>, %arg11: memref<1x128xf32, #tpu.memory_space<vmem>>, %arg12: memref<32x128xf32, #tpu.memory_space<vmem>>) attributes {dimension_semantics = [#tpu.dimension_semantics<parallel>], iteration_bounds = array<i64: 2>, scalar_prefetch = 0 : i64, scratch_operands = 0 : i64, tpu.core_type = #tpu.core_type<tc>, window_params = [{transform_indices = @transform_0, window_bounds = array<i64: 32, 16>}, {pipeline_mode = #tpu.pipeline_mode<synchronous>, transform_indices = @transform_1, window_bounds = array<i64: 16, 32>}, {pipeline_mode = #tpu.pipeline_mode<synchronous>, transform_indices = @transform_2, window_bounds = array<i64: 1, 32>}, {pipeline_mode = #tpu.pipeline_mode<synchronous>, transform_indices = @transform_3, window_bounds = array<i64: 32, 32>}, {pipeline_mode = #tpu.pipeline_mode<synchronous>, transform_indices = @transform_4, window_bounds = array<i64: 1, 32>}, {pipeline_mode = #tpu.pipeline_mode<synchronous>, transform_indices = @transform_5, window_bounds = array<i64: 32, 128>}, {pipeline_mode = #tpu.pipeline_mode<synchronous>, transform_indices = @transform_6, window_bounds = array<i64: 1, 128>}, {pipeline_mode = #tpu.pipeline_mode<synchronous>, transform_indices = @transform_7, window_bounds = array<i64: 128, 128>}, {pipeline_mode = #tpu.pipeline_mode<synchronous>, transform_indices = @transform_8, window_bounds = array<i64: 1, 128>}, {pipeline_mode = #tpu.pipeline_mode<synchronous>, transform_indices = @transform_9, window_bounds = array<i64: 128, 128>}, {pipeline_mode = #tpu.pipeline_mode<synchronous>, transform_indices = @transform_10, window_bounds = array<i64: 1, 128>}, {transform_indices = @transform_11, window_bounds = array<i64: 32, 128>}]} {
    %c0 = arith.constant 0 : index
    %c0_0 = arith.constant 0 : index
    %0 = vector.load %arg1[%c0, %c0_0] : memref<32x16xf32, #tpu.memory_space<vmem>>, vector<32x16xf32>
    %c0_1 = arith.constant 0 : index
    %c0_2 = arith.constant 0 : index
    %1 = vector.load %arg2[%c0_1, %c0_2] : memref<16x32xf32, #tpu.memory_space<vmem>>, vector<16x32xf32>
    %cst = arith.constant dense<0.000000e+00> : vector<32x32xf32>
    %2 = tpu.matmul %0, %1, %cst {dimension_numbers = #tpu.dot_dimension_numbers<[1], [0], [0], [1], [0, 0, 1, 1], [], []>} : vector<32x16xf32>, vector<16x32xf32>, vector<32x32xf32> -> vector<32x32xf32>
    %c0_3 = arith.constant 0 : index
    %c0_4 = arith.constant 0 : index
    %3 = vector.load %arg3[%c0_3, %c0_4] : memref<1x32xf32, #tpu.memory_space<vmem>>, vector<1x32xf32>
    %4 = vector.broadcast %3 : vector<1x32xf32> to vector<32x32xf32>
    %5 = arith.addf %2, %4 : vector<32x32xf32>
    %6 = math.tanh %5 : vector<32x32xf32>
    %c0_5 = arith.constant 0 : index
    %c0_6 = arith.constant 0 : index
    %7 = vector.load %arg4[%c0_5, %c0_6] : memref<32x32xf32, #tpu.memory_space<vmem>>, vector<32x32xf32>
    %cst_7 = arith.constant dense<0.000000e+00> : vector<32x32xf32>
    %8 = tpu.matmul %6, %7, %cst_7 {dimension_numbers = #tpu.dot_dimension_numbers<[1], [0], [0], [1], [0, 0, 1, 1], [], []>} : vector<32x32xf32>, vector<32x32xf32>, vector<32x32xf32> -> vector<32x32xf32>
    %c0_8 = arith.constant 0 : index
    %c0_9 = arith.constant 0 : index
    %9 = vector.load %arg5[%c0_8, %c0_9] : memref<1x32xf32, #tpu.memory_space<vmem>>, vector<1x32xf32>
    %10 = vector.broadcast %9 : vector<1x32xf32> to vector<32x32xf32>
    %11 = arith.addf %8, %10 : vector<32x32xf32>
    %12 = math.tanh %11 : vector<32x32xf32>
    %c0_10 = arith.constant 0 : index
    %c0_11 = arith.constant 0 : index
    %13 = vector.load %arg6[%c0_10, %c0_11] : memref<32x128xf32, #tpu.memory_space<vmem>>, vector<32x128xf32>
    %cst_12 = arith.constant dense<0.000000e+00> : vector<32x128xf32>
    %14 = tpu.matmul %12, %13, %cst_12 {dimension_numbers = #tpu.dot_dimension_numbers<[1], [0], [0], [1], [0, 0, 1, 1], [], []>} : vector<32x32xf32>, vector<32x128xf32>, vector<32x128xf32> -> vector<32x128xf32>
    %c0_13 = arith.constant 0 : index
    %c0_14 = arith.constant 0 : index
    %15 = vector.load %arg7[%c0_13, %c0_14] : memref<1x128xf32, #tpu.memory_space<vmem>>, vector<1x128xf32>
    %16 = vector.broadcast %15 : vector<1x128xf32> to vector<32x128xf32>
    %17 = arith.addf %14, %16 : vector<32x128xf32>
    %18 = math.tanh %17 : vector<32x128xf32>
    %c0_15 = arith.constant 0 : index
    %c0_16 = arith.constant 0 : index
    %19 = vector.load %arg8[%c0_15, %c0_16] : memref<128x128xf32, #tpu.memory_space<vmem>>, vector<128x128xf32>
    %cst_17 = arith.constant dense<0.000000e+00> : vector<32x128xf32>
    %20 = tpu.matmul %18, %19, %cst_17 {dimension_numbers = #tpu.dot_dimension_numbers<[1], [0], [0], [1], [0, 0, 1, 1], [], []>} : vector<32x128xf32>, vector<128x128xf32>, vector<32x128xf32> -> vector<32x128xf32>
    %c0_18 = arith.constant 0 : index
    %c0_19 = arith.constant 0 : index
    %21 = vector.load %arg9[%c0_18, %c0_19] : memref<1x128xf32, #tpu.memory_space<vmem>>, vector<1x128xf32>
    %22 = vector.broadcast %21 : vector<1x128xf32> to vector<32x128xf32>
    %23 = arith.addf %20, %22 : vector<32x128xf32>
    %c0_20 = arith.constant 0 : index
    %c0_21 = arith.constant 0 : index
    %24 = vector.load %arg11[%c0_20, %c0_21] : memref<1x128xf32, #tpu.memory_space<vmem>>, vector<1x128xf32>
    %cst_22 = arith.constant 0.000000e+00 : f32
    %25 = vector.broadcast %cst_22 : f32 to vector<1x128xf32>
    %26 = arith.cmpf one, %24, %25 : vector<1x128xf32>
    %cst_23 = arith.constant 0xFF800000 : f32
    %27 = vector.shape_cast %26 : vector<1x128xi1> to vector<1x128xi1>
    %28 = vector.broadcast %27 : vector<1x128xi1> to vector<32x128xi1>
    %29 = vector.broadcast %cst_23 : f32 to vector<32x128xf32>
    %30 = arith.select %28, %23, %29 : vector<32x128xi1>, vector<32x128xf32>
    %cst_24 = arith.constant dense<0xFF800000> : vector<32xf32>
    %31 = vector.multi_reduction <maximumf>, %30, %cst_24 [1] : vector<32x128xf32> to vector<32xf32>
    %32 = vector.shape_cast %31 : vector<32xf32> to vector<32x1xf32>
    %33 = vector.broadcast %32 : vector<32x1xf32> to vector<32x128xf32>
    %34 = arith.subf %23, %33 : vector<32x128xf32>
    %35 = math.exp %34 : vector<32x128xf32>
    %cst_25 = arith.constant 0.000000e+00 : f32
    %36 = vector.shape_cast %26 : vector<1x128xi1> to vector<1x128xi1>
    %37 = vector.broadcast %36 : vector<1x128xi1> to vector<32x128xi1>
    %38 = vector.broadcast %cst_25 : f32 to vector<32x128xf32>
    %39 = arith.select %37, %35, %38 : vector<32x128xi1>, vector<32x128xf32>
    %c0_26 = arith.constant 0 : index
    %c0_27 = arith.constant 0 : index
    %40 = vector.load %arg10[%c0_26, %c0_27] : memref<128x128xf32, #tpu.memory_space<vmem>>, vector<128x128xf32>
    %cst_28 = arith.constant dense<0.000000e+00> : vector<32x128xf32>
    %41 = tpu.matmul %39, %40, %cst_28 {dimension_numbers = #tpu.dot_dimension_numbers<[1], [0], [0], [1], [0, 0, 1, 1], [], []>} : vector<32x128xf32>, vector<128x128xf32>, vector<32x128xf32> -> vector<32x128xf32>
    %cst_29 = arith.constant 1.000000e+00 : f32
    %42 = vector.shape_cast %26 : vector<1x128xi1> to vector<1x128xi1>
    %43 = vector.broadcast %42 : vector<1x128xi1> to vector<32x128xi1>
    %44 = vector.broadcast %cst_29 : f32 to vector<32x128xf32>
    %45 = arith.select %43, %41, %44 : vector<32x128xi1>, vector<32x128xf32>
    %46 = arith.divf %39, %45 : vector<32x128xf32>
    %47 = vector.shape_cast %26 : vector<1x128xi1> to vector<1x128xi1>
    %48 = vector.broadcast %47 : vector<1x128xi1> to vector<32x128xi1>
    %49 = arith.select %48, %46, %23 : vector<32x128xi1>, vector<32x128xf32>
    %c0_30 = arith.constant 0 : index
    %c0_31 = arith.constant 0 : index
    %50 = vector.load %arg12[%c0_30, %c0_31] : memref<32x128xf32, #tpu.memory_space<vmem>>, vector<32x128xf32>
    tpu.vector_store %arg12[%c0_30, %c0_31], %49 {strides = array<i32>} : memref<32x128xf32, #tpu.memory_space<vmem>>, vector<32x128xf32>,
    return
  }
  func.func @transform_0(%arg0: i32) -> (i32, i32) {
    %c0_i32 = arith.constant 0 : i32
    %c0_i32_0 = arith.constant 0 : i32
    return %arg0, %c0_i32 : i32, i32
  }
  func.func @transform_1(%arg0: i32) -> (i32, i32) {
    %c0_i32 = arith.constant 0 : i32
    %c0_i32_0 = arith.constant 0 : i32
    %c0_i32_1 = arith.constant 0 : i32
    return %c0_i32, %c0_i32_0 : i32, i32
  }
  func.func @transform_2(%arg0: i32) -> (i32, i32) {
    %c0_i32 = arith.constant 0 : i32
    %c0_i32_0 = arith.constant 0 : i32
    %c0_i32_1 = arith.constant 0 : i32
    return %c0_i32, %c0_i32_0 : i32, i32
  }
  func.func @transform_3(%arg0: i32) -> (i32, i32) {
    %c0_i32 = arith.constant 0 : i32
    %c0_i32_0 = arith.constant 0 : i32
    %c0_i32_1 = arith.constant 0 : i32
    return %c0_i32, %c0_i32_0 : i32, i32
  }
  func.func @transform_4(%arg0: i32) -> (i32, i32) {
    %c0_i32 = arith.constant 0 : i32
    %c0_i32_0 = arith.constant 0 : i32
    %c0_i32_1 = arith.constant 0 : i32
    return %c0_i32, %c0_i32_0 : i32, i32
  }
  func.func @transform_5(%arg0: i32) -> (i32, i32) {
    %c0_i32 = arith.constant 0 : i32
    %c0_i32_0 = arith.constant 0 : i32
    %c0_i32_1 = arith.constant 0 : i32
    return %c0_i32, %c0_i32_0 : i32, i32
  }
  func.func @transform_6(%arg0: i32) -> (i32, i32) {
    %c0_i32 = arith.constant 0 : i32
    %c0_i32_0 = arith.constant 0 : i32
    %c0_i32_1 = arith.constant 0 : i32
    return %c0_i32, %c0_i32_0 : i32, i32
  }
  func.func @transform_7(%arg0: i32) -> (i32, i32) {
    %c0_i32 = arith.constant 0 : i32
    %c0_i32_0 = arith.constant 0 : i32
    %c0_i32_1 = arith.constant 0 : i32
    return %c0_i32, %c0_i32_0 : i32, i32
  }
  func.func @transform_8(%arg0: i32) -> (i32, i32) {
    %c0_i32 = arith.constant 0 : i32
    %c0_i32_0 = arith.constant 0 : i32
    %c0_i32_1 = arith.constant 0 : i32
    return %c0_i32, %c0_i32_0 : i32, i32
  }
  func.func @transform_9(%arg0: i32) -> (i32, i32) {
    %c0_i32 = arith.constant 0 : i32
    %c0_i32_0 = arith.constant 0 : i32
    %c0_i32_1 = arith.constant 0 : i32
    return %c0_i32, %c0_i32_0 : i32, i32
  }
  func.func @transform_10(%arg0: i32) -> (i32, i32) {
    %c0_i32 = arith.constant 0 : i32
    %c0_i32_0 = arith.constant 0 : i32
    %c0_i32_1 = arith.constant 0 : i32
    return %c0_i32, %c0_i32_0 : i32, i32
  }
  func.func @transform_11(%arg0: i32) -> (i32, i32) {
    %c0_i32 = arith.constant 0 : i32
    %c0_i32_0 = arith.constant 0 : i32
    return %arg0, %c0_i32 : i32, i32
  }
}

</mosaic_0001>

<llo_original>
// kernel: tpu_custom_call.1
$region0: #{tpu_custom_call.1}
  #allocation0 [shape = 'u32[]', space=smem, size = 0x4, offset = 0x4, fixed_abs, tag = 'smem constant byte address 0x4 - core index']
  #allocation1 [shape = 'u32[144,128]{1,0:T(1,128)}', space=vmem, size = 0x12000, scoped, tag = 'internal scratch']
  %s0 = inlined_call_operand.vmem [shape: f32[64,16], index: 0, kind: input, shape index: {}]
  %s1 = inlined_call_operand.vmem [shape: f32[16,32], index: 1, kind: input, shape index: {}]
  %s2 = inlined_call_operand.vmem [shape: f32[1,32], index: 2, kind: input, shape index: {}]
  %s3 = inlined_call_operand.vmem [shape: f32[32,32], index: 3, kind: input, shape index: {}]
  %s4 = inlined_call_operand.vmem [shape: f32[1,32], index: 4, kind: input, shape index: {}]
  %s5 = inlined_call_operand.vmem [shape: f32[32,128], index: 5, kind: input, shape index: {}]
  %s6 = inlined_call_operand.vmem [shape: f32[1,128], index: 6, kind: input, shape index: {}]
  %s7 = inlined_call_operand.hbm [shape: f32[128,128], index: 7, kind: input, shape index: {}]
  %s8 = inlined_call_operand.vmem [shape: f32[1,128], index: 8, kind: input, shape index: {}]
  %s9 = inlined_call_operand.hbm [shape: f32[128,128], index: 9, kind: input, shape index: {}]
  %s10 = inlined_call_operand.vmem [shape: f32[1,128], index: 10, kind: input, shape index: {}]
  %s11 = inlined_call_operand.hbm [shape: f32[64,128], index: 11, kind: output, shape index: {}]
  %s12 = sld [smem:[#allocation0]]
  $region85: #{tpu_custom_call.1} parent=0
    _
  %s14 = ssub.s32 1, %s12
  %s15 = scalar_select 0, %s14, %s12
  $region1: #{tpu_custom_call.1} parent=0
    #allocation2 [shape = 'u8[65536]{0}', space=vmem, size = 0x10000, scoped, tag = 'input window, operand 7, single buffered']
    #allocation3 [shape = 's32[2]{0}', space=sflag, size = 0x8, scoped, tag = 'scoped memory for tpu_custom_call.1']
    #allocation4 [shape = 's32[2]{0}', space=sflag, size = 0x8, scoped, tag = 'scoped memory for tpu_custom_call.1']
    #allocation5 [shape = 'u8[65536]{0}', space=vmem, size = 0x10000, scoped, tag = 'input window, operand 9, single buffered']
    #allocation6 [shape = 's32[1]{0}', space=sflag, size = 0x4, scoped, tag = 'scoped memory for tpu_custom_call.1']
    #allocation7 [shape = 'u8[32768]{0}', space=vmem, size = 0x8000, scoped, tag = 'output window, operand 0']
    %16 = vsyncpa [#allocation3], 0
    %17 = vsyncpa [#allocation6], 0
    %18 = vsyncpa [#allocation4], 0
    %s19 = scalar_lea.sflag [#allocation4], 1
    %20 = vsyncpa %s19, 0
    loop: start=0, step=1, limit=4
    $region2: #{tpu_custom_call.1} parent=1 // loop_pre_header
      _
    $region3: #{tpu_custom_call.1} parent=1 // loop_header
      %s22 = sphi 0, %s26
      %p23 = scmp.ge.s32.totalorder %s22, 4
      %s32 = sphi 0, %s34
      %s35 = sphi 0, %s32
      %s36 = sphi 0, %s35
      %s52 = sphi 0, %s36
      %s56 = sphi 0, %s56
      %s58 = sphi 0, %s56
      %s59 = sphi 0, %s58
      %s73 = sphi 0, %s59
      %s77 = sphi 0, %s77
      %s79 = sphi 0, %s77
      %s80 = sphi 0, %s79
      %s94 = sphi 0, %s80
      %s98 = sphi 0, %s98
      %s100 = sphi 0, %s98
      %s101 = sphi 0, %s100
      %s115 = sphi 0, %s101
      %s119 = sphi 0, %s119
      %s121 = sphi 0, %s119
      %s122 = sphi 0, %s121
      %s136 = sphi 0, %s122
      %s140 = sphi 0, %s140
      %s142 = sphi 0, %s140
      %s143 = sphi 0, %s142
      %s157 = sphi 0, %s143
      %s161 = sphi 0, %s161
      %s163 = sphi 0, %s161
      %s164 = sphi 0, %s163
      %s178 = sphi 0, %s164
      %s182 = sphi 0, %s182
      %s184 = sphi 0, %s182
      %s185 = sphi 0, %s184
      %s199 = sphi 0, %s185
      %s203 = sphi 0, %s203
      %s205 = sphi 0, %s203
      %s206 = sphi 0, %s205
      %s220 = sphi 0, %s206
      %s224 = sphi 0, %s224
      %s226 = sphi 0, %s224
      %s227 = sphi 0, %s226
      %s241 = sphi 0, %s227
      %s245 = sphi 0, %s245
      %s247 = sphi 0, %s245
      %s248 = sphi 0, %s247
      %s262 = sphi 0, %s248
      %s268 = sphi 0, %s270
      %s271 = sphi 0, %s268
      %s272 = sphi 0, %s271
      %s288 = sphi 0, %s272
    $region4: #{tpu_custom_call.1} parent=1 // loop_header_branch
      %25 = sbr.rel (%p23) target = $region8
    $region5: #{tpu_custom_call.1} parent=1 // loop_body
      %s27 = ssub.s32 %s22, 1
      %s28 = ssub.s32 %s22, 2
      %s29 = sadd.s32 %s22, 1
      %s30 = ssub.s32 %s22, %s29
      %p31 = scmp.eq.s32.totalorder %s30, 0
      %s33 = sadd.s32 %s32, 1
      %s34 = scalar_select %p31, %s32, %s33
      %p37 = pneg %p31
      %p38 = scmp.eq.s32.totalorder %s22, 1
      %p39 = por %p37, %p38
      %p40 = scmp.ne.s32.totalorder %s32, %s35
      %p41 = scmp.eq.s32.totalorder %s22, 0
      %p42 = por %p40, %p41
      %p43 = scmp.ne.s32.totalorder %s32, %s35
      %p44 = scmp.eq.s32.totalorder %s27, 1
      %p45 = por %p43, %p44
      %p46 = scmp.ne.s32.totalorder %s35, %s36
      %p47 = scmp.eq.s32.totalorder %s27, 0
      %p48 = por %p46, %p47
      %p49 = scmp.ne.s32.totalorder %s35, %s36
      %p50 = scmp.eq.s32.totalorder %s28, 1
      %p51 = por %p49, %p50
      %p53 = scmp.ne.s32.totalorder %s36, %s52
      %p54 = scmp.eq.s32.totalorder %s28, 0
      %p55 = por %p53, %p54
      %s57 = sadd.s32 %s56, 1
      %p60 = scmp.eq.s32.totalorder %s22, 1
      %p61 = scmp.ne.s32.totalorder %s56, %s58
      %p62 = scmp.eq.s32.totalorder %s22, 0
      %p63 = por %p61, %p62
      %p64 = scmp.ne.s32.totalorder %s56, %s58
      %p65 = scmp.eq.s32.totalorder %s27, 1
      %p66 = por %p64, %p65
      %p67 = scmp.ne.s32.totalorder %s58, %s59
      %p68 = scmp.eq.s32.totalorder %s27, 0
      %p69 = por %p67, %p68
      %p70 = scmp.ne.s32.totalorder %s58, %s59
      %p71 = scmp.eq.s32.totalorder %s28, 1
      %p72 = por %p70, %p71
      %p74 = scmp.ne.s32.totalorder %s59, %s73
      %p75 = scmp.eq.s32.totalorder %s28, 0
      %p76 = por %p74, %p75
      %s78 = sadd.s32 %s77, 1
      %p81 = scmp.eq.s32.totalorder %s22, 1
      %p82 = scmp.ne.s32.totalorder %s77, %s79
      %p83 = scmp.eq.s32.totalorder %s22, 0
      %p84 = por %p82, %p83
      %p85 = scmp.ne.s32.totalorder %s77, %s79
      %p86 = scmp.eq.s32.totalorder %s27, 1
      %p87 = por %p85, %p86
      %p88 = scmp.ne.s32.totalorder %s79, %s80
      %p89 = scmp.eq.s32.totalorder %s27, 0
      %p90 = por %p88, %p89
      %p91 = scmp.ne.s32.totalorder %s79, %s80
      %p92 = scmp.eq.s32.totalorder %s28, 1
      %p93 = por %p91, %p92
      %p95 = scmp.ne.s32.totalorder %s80, %s94
      %p96 = scmp.eq.s32.totalorder %s28, 0
      %p97 = por %p95, %p96
      %s99 = sadd.s32 %s98, 1
      %p102 = scmp.eq.s32.totalorder %s22, 1
      %p103 = scmp.ne.s32.totalorder %s98, %s100
      %p104 = scmp.eq.s32.totalorder %s22, 0
      %p105 = por %p103, %p104
      %p106 = scmp.ne.s32.totalorder %s98, %s100
      %p107 = scmp.eq.s32.totalorder %s27, 1
      %p108 = por %p106, %p107
      %p109 = scmp.ne.s32.totalorder %s100, %s101
      %p110 = scmp.eq.s32.totalorder %s27, 0
      %p111 = por %p109, %p110
      %p112 = scmp.ne.s32.totalorder %s100, %s101
      %p113 = scmp.eq.s32.totalorder %s28, 1
      %p114 = por %p112, %p113
      %p116 = scmp.ne.s32.totalorder %s101, %s115
      %p117 = scmp.eq.s32.totalorder %s28, 0
      %p118 = por %p116, %p117
      %s120 = sadd.s32 %s119, 1
      %p123 = scmp.eq.s32.totalorder %s22, 1
      %p124 = scmp.ne.s32.totalorder %s119, %s121
      %p125 = scmp.eq.s32.totalorder %s22, 0
      %p126 = por %p124, %p125
      %p127 = scmp.ne.s32.totalorder %s119, %s121
      %p128 = scmp.eq.s32.totalorder %s27, 1
      %p129 = por %p127, %p128
      %p130 = scmp.ne.s32.totalorder %s121, %s122
      %p131 = scmp.eq.s32.totalorder %s27, 0
      %p132 = por %p130, %p131
      %p133 = scmp.ne.s32.totalorder %s121, %s122
      %p134 = scmp.eq.s32.totalorder %s28, 1
      %p135 = por %p133, %p134
      %p137 = scmp.ne.s32.totalorder %s122, %s136
      %p138 = scmp.eq.s32.totalorder %s28, 0
      %p139 = por %p137, %p138
      %s141 = sadd.s32 %s140, 1
      %p144 = scmp.eq.s32.totalorder %s22, 1
      %p145 = scmp.ne.s32.totalorder %s140, %s142
      %p146 = scmp.eq.s32.totalorder %s22, 0
      %p147 = por %p145, %p146
      %p148 = scmp.ne.s32.totalorder %s140, %s142
      %p149 = scmp.eq.s32.totalorder %s27, 1
      %p150 = por %p148, %p149
      %p151 = scmp.ne.s32.totalorder %s142, %s143
      %p152 = scmp.eq.s32.totalorder %s27, 0
      %p153 = por %p151, %p152
      %p154 = scmp.ne.s32.totalorder %s142, %s143
      %p155 = scmp.eq.s32.totalorder %s28, 1
      %p156 = por %p154, %p155
      %p158 = scmp.ne.s32.totalorder %s143, %s157
      %p159 = scmp.eq.s32.totalorder %s28, 0
      %p160 = por %p158, %p159
      %s162 = sadd.s32 %s161, 1
      %p165 = scmp.eq.s32.totalorder %s22, 1
      %p166 = scmp.ne.s32.totalorder %s161, %s163
      %p167 = scmp.eq.s32.totalorder %s22, 0
      %p168 = por %p166, %p167
      %p169 = scmp.ne.s32.totalorder %s161, %s163
      %p170 = scmp.eq.s32.totalorder %s27, 1
      %p171 = por %p169, %p170
      %p172 = scmp.ne.s32.totalorder %s163, %s164
      %p173 = scmp.eq.s32.totalorder %s27, 0
      %p174 = por %p172, %p173
      %p175 = scmp.ne.s32.totalorder %s163, %s164
      %p176 = scmp.eq.s32.totalorder %s28, 1
      %p177 = por %p175, %p176
      %p179 = scmp.ne.s32.totalorder %s164, %s178
      %p180 = scmp.eq.s32.totalorder %s28, 0
      %p181 = por %p179, %p180
      %s183 = sadd.s32 %s182, 1
      %p186 = scmp.eq.s32.totalorder %s22, 1
      %p187 = scmp.ne.s32.totalorder %s182, %s184
      %p188 = scmp.eq.s32.totalorder %s22, 0
      %p189 = por %p187, %p188
      %p190 = scmp.ne.s32.totalorder %s182, %s184
      %p191 = scmp.eq.s32.totalorder %s27, 1
      %p192 = por %p190, %p191
      %p193 = scmp.ne.s32.totalorder %s184, %s185
      %p194 = scmp.eq.s32.totalorder %s27, 0
      %p195 = por %p193, %p194
      %p196 = scmp.ne.s32.totalorder %s184, %s185
      %p197 = scmp.eq.s32.totalorder %s28, 1
      %p198 = por %p196, %p197
      %p200 = scmp.ne.s32.totalorder %s185, %s199
      %p201 = scmp.eq.s32.totalorder %s28, 0
      %p202 = por %p200, %p201
      %s204 = sadd.s32 %s203, 1
      %p207 = scmp.eq.s32.totalorder %s22, 1
      %p208 = scmp.ne.s32.totalorder %s203, %s205
      %p209 = scmp.eq.s32.totalorder %s22, 0
      %p210 = por %p208, %p209
      %p211 = scmp.ne.s32.totalorder %s203, %s205
      %p212 = scmp.eq.s32.totalorder %s27, 1
      %p213 = por %p211, %p212
      %p214 = scmp.ne.s32.totalorder %s205, %s206
      %p215 = scmp.eq.s32.totalorder %s27, 0
      %p216 = por %p214, %p215
      %p217 = scmp.ne.s32.totalorder %s205, %s206
      %p218 = scmp.eq.s32.totalorder %s28, 1
      %p219 = por %p217, %p218
      %p221 = scmp.ne.s32.totalorder %s206, %s220
      %p222 = scmp.eq.s32.totalorder %s28, 0
      %p223 = por %p221, %p222
      %s225 = sadd.s32 %s224, 1
      %p228 = scmp.eq.s32.totalorder %s22, 1
      %p229 = scmp.ne.s32.totalorder %s224, %s226
      %p230 = scmp.eq.s32.totalorder %s22, 0
      %p231 = por %p229, %p230
      %p232 = scmp.ne.s32.totalorder %s224, %s226
      %p233 = scmp.eq.s32.totalorder %s27, 1
      %p234 = por %p232, %p233
      %p235 = scmp.ne.s32.totalorder %s226, %s227
      %p236 = scmp.eq.s32.totalorder %s27, 0
      %p237 = por %p235, %p236
      %p238 = scmp.ne.s32.totalorder %s226, %s227
      %p239 = scmp.eq.s32.totalorder %s28, 1
      %p240 = por %p238, %p239
      %p242 = scmp.ne.s32.totalorder %s227, %s241
      %p243 = scmp.eq.s32.totalorder %s28, 0
      %p244 = por %p242, %p243
      %s246 = sadd.s32 %s245, 1
      %p249 = scmp.eq.s32.totalorder %s22, 1
      %p250 = scmp.ne.s32.totalorder %s245, %s247
      %p251 = scmp.eq.s32.totalorder %s22, 0
      %p252 = por %p250, %p251
      %p253 = scmp.ne.s32.totalorder %s245, %s247
      %p254 = scmp.eq.s32.totalorder %s27, 1
      %p255 = por %p253, %p254
      %p256 = scmp.ne.s32.totalorder %s247, %s248
      %p257 = scmp.eq.s32.totalorder %s27, 0
      %p258 = por %p256, %p257
      %p259 = scmp.ne.s32.totalorder %s247, %s248
      %p260 = scmp.eq.s32.totalorder %s28, 1
      %p261 = por %p259, %p260
      %p263 = scmp.ne.s32.totalorder %s248, %s262
      %p264 = scmp.eq.s32.totalorder %s28, 0
      %p265 = por %p263, %p264
      %s266 = ssub.s32 %s22, %s29
      %p267 = scmp.eq.s32.totalorder %s266, 0
      %s269 = sadd.s32 %s268, 1
      %s270 = scalar_select %p267, %s268, %s269
      %p273 = pneg %p267
      %p274 = scmp.eq.s32.totalorder %s22, 1
      %p275 = por %p273, %p274
      %p276 = scmp.ne.s32.totalorder %s268, %s271
      %p277 = scmp.eq.s32.totalorder %s22, 0
      %p278 = por %p276, %p277
      %p279 = scmp.ne.s32.totalorder %s268, %s271
      %p280 = scmp.eq.s32.totalorder %s27, 1
      %p281 = por %p279, %p280
      %p282 = scmp.ne.s32.totalorder %s271, %s272
      %p283 = scmp.eq.s32.totalorder %s27, 0
      %p284 = por %p282, %p283
      %p285 = scmp.ne.s32.totalorder %s271, %s272
      %p286 = scmp.eq.s32.totalorder %s28, 1
      %p287 = por %p285, %p286
      %p289 = scmp.ne.s32.totalorder %s272, %s288
      %p290 = scmp.eq.s32.totalorder %s28, 0
      %p291 = por %p289, %p290
      %p292 = scmp.le.s32.totalorder 1, %s22
      %p293 = scmp.lt.s32.totalorder %s22, 3
      %p294 = pnand %p292, %p293
      %p295 = pneg %p294
      // Predicated region
      $region9: #{tpu_custom_call.1} parent=5 // pred_check
        _
      $region10: #{tpu_custom_call.1} parent=5 // pred_check_branch
        %297 = sbr.rel (%p294) target = $region12
      $region11: #{tpu_custom_call.1} parent=5 // pred_region
        %s298 = ssub.s32 %s22, 1
        // Predicated region
        $region13: #{tpu_custom_call.1} parent=11 // pred_check
          %p299 = pneg %p69
        $region14: #{tpu_custom_call.1} parent=11 // pred_check_branch
          %301 = sbr.rel (%p299) target = $region16
        $region15: #{tpu_custom_call.1} parent=11 // pred_region
          _
        $region16: #{tpu_custom_call.1} parent=11 // pred_fallthru
          _
        // Predicated region
        $region17: #{tpu_custom_call.1} parent=11 // pred_check
          %p302 = pneg %p90
        $region18: #{tpu_custom_call.1} parent=11 // pred_check_branch
          %304 = sbr.rel (%p302) target = $region20
        $region19: #{tpu_custom_call.1} parent=11 // pred_region
          _
        $region20: #{tpu_custom_call.1} parent=11 // pred_fallthru
          _
        // Predicated region
        $region21: #{tpu_custom_call.1} parent=11 // pred_check
          %p305 = pneg %p111
        $region22: #{tpu_custom_call.1} parent=11 // pred_check_branch
          %307 = sbr.rel (%p305) target = $region24
        $region23: #{tpu_custom_call.1} parent=11 // pred_region
          _
        $region24: #{tpu_custom_call.1} parent=11 // pred_fallthru
          _
        // Predicated region
        $region25: #{tpu_custom_call.1} parent=11 // pred_check
          %p308 = pneg %p132
        $region26: #{tpu_custom_call.1} parent=11 // pred_check_branch
          %310 = sbr.rel (%p308) target = $region28
        $region27: #{tpu_custom_call.1} parent=11 // pred_region
          _
        $region28: #{tpu_custom_call.1} parent=11 // pred_fallthru
          _
        // Predicated region
        $region29: #{tpu_custom_call.1} parent=11 // pred_check
          %p311 = pneg %p153
        $region30: #{tpu_custom_call.1} parent=11 // pred_check_branch
          %313 = sbr.rel (%p311) target = $region32
        $region31: #{tpu_custom_call.1} parent=11 // pred_region
          _
        $region32: #{tpu_custom_call.1} parent=11 // pred_fallthru
          _
        // Predicated region
        $region33: #{tpu_custom_call.1} parent=11 // pred_check
          %p314 = pneg %p174
        $region34: #{tpu_custom_call.1} parent=11 // pred_check_branch
          %316 = sbr.rel (%p314) target = $region36
        $region35: #{tpu_custom_call.1} parent=11 // pred_region
          _
        $region36: #{tpu_custom_call.1} parent=11 // pred_fallthru
          _
        // Predicated region
        $region37: #{tpu_custom_call.1} parent=11 // pred_check
          %p317 = pneg %p195
        $region38: #{tpu_custom_call.1} parent=11 // pred_check_branch
          %319 = sbr.rel (%p317) target = $region40
        $region39: #{tpu_custom_call.1} parent=11 // pred_region
          %s321 = ssub.s32 2048, 2048
          %322 = vsyncadd [#allocation3], %s321
          %s323 = sshll.u32 [#allocation2], 4
          %s324 = int_to_ptr.vmem [resolvable:$true] %s323
          %329 = dma.hbm_to_vmem [thread:$0]  %s7, 2048, %s324, [#allocation3], 128, 128, 8
        $region40: #{tpu_custom_call.1} parent=11 // pred_fallthru
          _
        // Predicated region
        $region41: #{tpu_custom_call.1} parent=11 // pred_check
          %p330 = pneg %p216
        $region42: #{tpu_custom_call.1} parent=11 // pred_check_branch
          %332 = sbr.rel (%p330) target = $region44
        $region43: #{tpu_custom_call.1} parent=11 // pred_region
          _
        $region44: #{tpu_custom_call.1} parent=11 // pred_fallthru
          _
        // Predicated region
        $region45: #{tpu_custom_call.1} parent=11 // pred_check
          %p333 = pneg %p237
        $region46: #{tpu_custom_call.1} parent=11 // pred_check_branch
          %335 = sbr.rel (%p333) target = $region48
        $region47: #{tpu_custom_call.1} parent=11 // pred_region
          %s337 = ssub.s32 2048, 2048
          %338 = vsyncadd [#allocation6], %s337
          %s339 = sshll.u32 [#allocation5], 4
          %s340 = int_to_ptr.vmem [resolvable:$true] %s339
          %345 = dma.hbm_to_vmem [thread:$0]  %s9, 2048, %s340, [#allocation6], 128, 128, 8
        $region48: #{tpu_custom_call.1} parent=11 // pred_fallthru
          _
        // Predicated region
        $region49: #{tpu_custom_call.1} parent=11 // pred_check
          %p346 = pneg %p258
        $region50: #{tpu_custom_call.1} parent=11 // pred_check_branch
          %348 = sbr.rel (%p346) target = $region52
        $region51: #{tpu_custom_call.1} parent=11 // pred_region
          _
        $region52: #{tpu_custom_call.1} parent=11 // pred_fallthru
          _
      $region12: #{tpu_custom_call.1} parent=5 // pred_fallthru
        _
      %p349 = scmp.lt.s32.totalorder %s22, 2
      // Predicated region
      $region53: #{tpu_custom_call.1} parent=5 // pred_check
        %p350 = pneg %p349
      $region54: #{tpu_custom_call.1} parent=5 // pred_check_branch
        %352 = sbr.rel (%p350) target = $region56
      $region55: #{tpu_custom_call.1} parent=5 // pred_region
        // Predicated region
        $region57: #{tpu_custom_call.1} parent=55 // pred_check
          %p353 = pneg %p42
        $region58: #{tpu_custom_call.1} parent=55 // pred_check_branch
          %355 = sbr.rel (%p353) target = $region60
        $region59: #{tpu_custom_call.1} parent=55 // pred_region
          %s356 = smul.u32 4, %s22
          %p357 = scmp.lt.s32.totalorder %s356, 7
          %s358 = scalar_select %p357, %s356, 7
          %s359 = smul.addr %s358, 8
          %s360 = scalar_lea.vmem %s0, %s359
          %s361 = smul.u32 4, %s22
        $region60: #{tpu_custom_call.1} parent=55 // pred_fallthru
          _
      $region56: #{tpu_custom_call.1} parent=5 // pred_fallthru
        _
      %p362 = scmp.le.s32.totalorder 1, %s22
      %p363 = scmp.lt.s32.totalorder %s22, 3
      %p364 = pnand %p362, %p363
      %p365 = pneg %p364
      // Predicated region
      $region61: #{tpu_custom_call.1} parent=5 // pred_check
        _
      $region62: #{tpu_custom_call.1} parent=5 // pred_check_branch
        %367 = sbr.rel (%p364) target = $region64
      $region63: #{tpu_custom_call.1} parent=5 // pred_region
        %s368 = ssub.s32 %s22, 1
        // Predicated region
        $region65: #{tpu_custom_call.1} parent=63 // pred_check
          %p369 = pneg %p195
        $region66: #{tpu_custom_call.1} parent=63 // pred_check_branch
          %371 = sbr.rel (%p369) target = $region68
        $region67: #{tpu_custom_call.1} parent=63 // pred_region
          %372 = dma.done [#allocation3], 2048
        $region68: #{tpu_custom_call.1} parent=63 // pred_fallthru
          _
        // Predicated region
        $region69: #{tpu_custom_call.1} parent=63 // pred_check
          %p373 = pneg %p237
        $region70: #{tpu_custom_call.1} parent=63 // pred_check_branch
          %375 = sbr.rel (%p373) target = $region72
        $region71: #{tpu_custom_call.1} parent=63 // pred_region
          %376 = dma.done [#allocation6], 2048
        $region72: #{tpu_custom_call.1} parent=63 // pred_fallthru
          _
        %s377 = smul.u32 4, %s27
        %p378 = scmp.lt.s32.totalorder %s377, 7
        %s379 = scalar_select %p378, %s377, 7
        %s380 = smul.addr %s379, 8
        %s381 = scalar_lea.vmem %s0, %s380
        %p382 = pneg %p48
        %p383 = pneg %p45
        %p384 = pneg %p69
        %p385 = pneg %p66
        %p386 = pneg %p90
        %p387 = pneg %p87
        %p388 = pneg %p111
        %p389 = pneg %p108
        %p390 = pneg %p132
        %p391 = pneg %p129
        %p392 = pneg %p153
        %p393 = pneg %p150
        %p394 = pneg %p174
        %p395 = pneg %p171
        %p396 = pneg %p195
        %p397 = pneg %p192
        %p398 = pneg %p216
        %p399 = pneg %p213
        %p400 = pneg %p237
        %p401 = pneg %p234
        %p402 = pneg %p258
        %p403 = pneg %p255
        %p404 = pneg %p284
        %p405 = pneg %p281
        %s406 = sand.u32 %s271, 1
        %s407 = scalar_lea.sflag [#allocation4], %s406
        %s408 = sand.u32 %s271, 1
        %s409 = smul.addr %s408, 32
        %s410 = scalar_lea.vmem [#allocation7], %s409
        %s411 = smul.u32 4, %s27
        %p412 = scmp.lt.s32.totalorder %s411, 7
        %s413 = scalar_select %p412, %s411, 7
        %s414 = smul.addr %s413, 8
        %s415 = scalar_lea.vmem %s0, %s414
        %s416 = smul.u32 4, %s27
        %s417 = smul.u32 4, %s27
        %v418 = vld [vmem:[%s415] sm:$0xff]
        %v419 = vld [vmem:[%s415 + $0x8] sm:$0xff]
        %v420 = vld [vmem:[%s415 + $0x10] sm:$0xff]
        %v421 = vld [vmem:[%s415 + $0x18] sm:$0xff]
        %v422 = vld [vmem:[%s1] sm:$0xff]
        %v423 = vld [vmem:[%s1 + $0x8] sm:$0xff]
        %v424 = vld [vmem:[%s2] sm:$0x1]
        %v426 = vlaneseq
        %v427 = vshrl.u32 %v426, 7
        %v428 = vsub.s32 0, %v427
        %v429 = vrot.slane %v424, %v428
        %vm431 = vcmask 130048
        %v433 = vsel %vm431, %v418, 0
        %v436 = vsel %vm431, %v419, 0
        %v439 = vsel %vm431, %v420, 0
        %v442 = vsel %vm431, %v421, 0
        %444 = vmatprep.subr.mxu0 0.0
        %445 = vmatpush1.msra.mxu0 %v422
        %446 = vmatprep.subr.mxu0 0.0
        %447 = vmatpush1.msra.mxu0 %v423
        %448 = vmatprep.subr.mxu0 0.0
        %449 = vmatpush1.msra.mxu0 0.0
        %450 = vmatprep.subr.mxu0 0.0
        %451 = vmatpush1.msra.mxu0 0.0
        %452 = vmatprep.subr.mxu0 0.0
        %453 = vmatpush1.msra.mxu0 0.0
        %454 = vmatprep.subr.mxu0 0.0
        %455 = vmatpush1.msra.mxu0 0.0
        %456 = vmatprep.subr.mxu0 0.0
        %457 = vmatpush1.msra.mxu0 0.0
        %458 = vmatprep.subr.mxu0 0.0
        %459 = vmatpush1.msra.mxu0 0.0
        %460 = vmatprep.subr.mxu0 0.0
        %461 = vmatpush1.msra.mxu0 0.0
        %462 = vmatprep.subr.mxu0 0.0
        %463 = vmatpush1.msra.mxu0 0.0
        %464 = vmatprep.subr.mxu0 0.0
        %465 = vmatpush1.msra.mxu0 0.0
        %466 = vmatprep.subr.mxu0 0.0
        %467 = vmatpush1.msra.mxu0 0.0
        %468 = vmatprep.subr.mxu0 0.0
        %469 = vmatpush1.msra.mxu0 0.0
        %470 = vmatprep.subr.mxu0 0.0
        %471 = vmatpush1.msra.mxu0 0.0
        %472 = vmatprep.subr.mxu0 0.0
        %473 = vmatpush1.msra.mxu0 0.0
        %474 = vmatprep.subr.mxu0 0.0
        %475 = vmatpush1.msra.mxu0 0.0
        %476 = vmatprep.subr.mxu0 0.0
        %477 = vmatpush1.msra.mxu0 0.0
        %478 = vmatprep.subr.mxu0 0.0
        %479 = vmatpush1.msra.mxu0 0.0
        %480 = vmatprep.subr.mxu0 0.0
        %481 = vmatpush1.msra.mxu0 0.0
        %482 = vmatprep.subr.mxu0 0.0
        %483 = vmatpush1.msra.mxu0 0.0
        %484 = vmatprep.subr.mxu0 0.0
        %485 = vmatpush1.msra.mxu0 0.0
        %486 = vmatprep.subr.mxu0 0.0
        %487 = vmatpush1.msra.mxu0 0.0
        %488 = vmatprep.subr.mxu0 0.0
        %489 = vmatpush1.msra.mxu0 0.0
        %490 = vmatprep.subr.mxu0 0.0
        %491 = vmatpush1.msra.mxu0 0.0
        %492 = vmatprep.subr.mxu0 0.0
        %493 = vmatpush1.msra.mxu0 0.0
        %494 = vmatprep.subr.mxu0 0.0
        %495 = vmatpush1.msra.mxu0 0.0
        %496 = vmatprep.subr.mxu0 0.0
        %497 = vmatpush1.msra.mxu0 0.0
        %498 = vmatprep.subr.mxu0 0.0
        %499 = vmatpush1.msra.mxu0 0.0
        %500 = vmatprep.subr.mxu0 0.0
        %501 = vmatpush1.msra.mxu0 0.0
        %502 = vmatprep.subr.mxu0 0.0
        %503 = vmatpush1.msra.mxu0 0.0
        %504 = vmatprep.subr.mxu0 0.0
        %505 = vmatpush1.msra.mxu0 0.0
        %506 = vmatprep.subr.mxu0 0.0
        %507 = vmatpush1.msra.mxu0 0.0
        %508 = vmatprep.mubr.f32.mxu0 0.0
        %509 = vmatmul.mubr.f32.gmra.mrb[0].mxu0 %v433
        %v510 = vpop.f32.mrb[0].mxu0
        %v511 = vadd.f32 %v429, %v510
        %v512 = vpop.f32.mrb[0].mxu0
        %513 = vmatprep.mubr.f32.mxu0 0.0
        %514 = vmatmul.mubr.f32.gmra.mrb[0].mxu0 %v436
        %v515 = vpop.f32.mrb[0].mxu0
        %v516 = vadd.f32 %v429, %v515
        %v517 = vpop.f32.mrb[0].mxu0
        %518 = vmatprep.mubr.f32.mxu0 0.0
        %519 = vmatmul.mubr.f32.gmra.mrb[0].mxu0 %v439
        %v520 = vpop.f32.mrb[0].mxu0
        %v521 = vadd.f32 %v429, %v520
        %v522 = vpop.f32.mrb[0].mxu0
        %523 = vmatprep.mubr.f32.mxu0 0.0
        %524 = vmatmul.mubr.f32.gmra.mrb[0].mxu0 %v442
        %v525 = vpop.f32.mrb[0].mxu0
        %v526 = vadd.f32 %v429, %v525
        %v527 = vpop.f32.mrb[0].mxu0
        %528 = vdwg.mxu0
        %v529 = vtanh.pop %v511
        %v530 = vtanh.pop %v516
        %v531 = vtanh.pop %v521
        %v532 = vtanh.pop %v526
        %v533 = vld [vmem:[%s3] sm:$0xff]
        %v534 = vld [vmem:[%s3 + $0x8] sm:$0xff]
        %v535 = vld [vmem:[%s3 + $0x10] sm:$0xff]
        %v536 = vld [vmem:[%s3 + $0x18] sm:$0xff]
        %v537 = vld [vmem:[%s4] sm:$0x1]
        %v539 = vlaneseq
        %v540 = vshrl.u32 %v539, 7
        %v541 = vsub.s32 0, %v540
        %v542 = vrot.slane %v537, %v541
        %vm544 = vcmask 261120
        %v546 = vsel %vm544, %v529, 0
        %v549 = vsel %vm544, %v530, 0
        %v552 = vsel %vm544, %v531, 0
        %v555 = vsel %vm544, %v532, 0
        %557 = vmatprep.subr.mxu0 0.0
        %558 = vmatpush1.msra.mxu0 %v533
        %559 = vmatprep.subr.mxu0 0.0
        %560 = vmatpush1.msra.mxu0 %v534
        %561 = vmatprep.subr.mxu0 0.0
        %562 = vmatpush1.msra.mxu0 %v535
        %563 = vmatprep.subr.mxu0 0.0
        %564 = vmatpush1.msra.mxu0 %v536
        %565 = vmatprep.subr.mxu0 0.0
        %566 = vmatpush1.msra.mxu0 0.0
        %567 = vmatprep.subr.mxu0 0.0
        %568 = vmatpush1.msra.mxu0 0.0
        %569 = vmatprep.subr.mxu0 0.0
        %570 = vmatpush1.msra.mxu0 0.0
        %571 = vmatprep.subr.mxu0 0.0
        %572 = vmatpush1.msra.mxu0 0.0
        %573 = vmatprep.subr.mxu0 0.0
        %574 = vmatpush1.msra.mxu0 0.0
        %575 = vmatprep.subr.mxu0 0.0
        %576 = vmatpush1.msra.mxu0 0.0
        %577 = vmatprep.subr.mxu0 0.0
        %578 = vmatpush1.msra.mxu0 0.0
        %579 = vmatprep.subr.mxu0 0.0
        %580 = vmatpush1.msra.mxu0 0.0
        %581 = vmatprep.subr.mxu0 0.0
        %582 = vmatpush1.msra.mxu0 0.0
        %583 = vmatprep.subr.mxu0 0.0
        %584 = vmatpush1.msra.mxu0 0.0
        %585 = vmatprep.subr.mxu0 0.0
        %586 = vmatpush1.msra.mxu0 0.0
        %587 = vmatprep.subr.mxu0 0.0
        %588 = vmatpush1.msra.mxu0 0.0
        %589 = vmatprep.subr.mxu0 0.0
        %590 = vmatpush1.msra.mxu0 0.0
        %591 = vmatprep.subr.mxu0 0.0
        %592 = vmatpush1.msra.mxu0 0.0
        %593 = vmatprep.subr.mxu0 0.0
        %594 = vmatpush1.msra.mxu0 0.0
        %595 = vmatprep.subr.mxu0 0.0
        %596 = vmatpush1.msra.mxu0 0.0
        %597 = vmatprep.subr.mxu0 0.0
        %598 = vmatpush1.msra.mxu0 0.0
        %599 = vmatprep.subr.mxu0 0.0
        %600 = vmatpush1.msra.mxu0 0.0
        %601 = vmatprep.subr.mxu0 0.0
        %602 = vmatpush1.msra.mxu0 0.0
        %603 = vmatprep.subr.mxu0 0.0
        %604 = vmatpush1.msra.mxu0 0.0
        %605 = vmatprep.subr.mxu0 0.0
        %606 = vmatpush1.msra.mxu0 0.0
        %607 = vmatprep.subr.mxu0 0.0
        %608 = vmatpush1.msra.mxu0 0.0
        %609 = vmatprep.subr.mxu0 0.0
        %610 = vmatpush1.msra.mxu0 0.0
        %611 = vmatprep.subr.mxu0 0.0
        %612 = vmatpush1.msra.mxu0 0.0
        %613 = vmatprep.subr.mxu0 0.0
        %614 = vmatpush1.msra.mxu0 0.0
        %615 = vmatprep.subr.mxu0 0.0
        %616 = vmatpush1.msra.mxu0 0.0
        %617 = vmatprep.subr.mxu0 0.0
        %618 = vmatpush1.msra.mxu0 0.0
        %619 = vmatprep.subr.mxu0 0.0
        %620 = vmatpush1.msra.mxu0 0.0
        %621 = vmatprep.mubr.f32.mxu0 0.0
        %622 = vmatmul.mubr.f32.gmra.mrb[0].mxu0 %v546
        %v623 = vpop.f32.mrb[0].mxu0
        %v624 = vadd.f32 %v542, %v623
        %v625 = vpop.f32.mrb[0].mxu0
        %626 = vmatprep.mubr.f32.mxu0 0.0
        %627 = vmatmul.mubr.f32.gmra.mrb[0].mxu0 %v549
        %v628 = vpop.f32.mrb[0].mxu0
        %v629 = vadd.f32 %v542, %v628
        %v630 = vpop.f32.mrb[0].mxu0
        %631 = vmatprep.mubr.f32.mxu0 0.0
        %632 = vmatmul.mubr.f32.gmra.mrb[0].mxu0 %v552
        %v633 = vpop.f32.mrb[0].mxu0
        %v634 = vadd.f32 %v542, %v633
        %v635 = vpop.f32.mrb[0].mxu0
        %636 = vmatprep.mubr.f32.mxu0 0.0
        %637 = vmatmul.mubr.f32.gmra.mrb[0].mxu0 %v555
        %v638 = vpop.f32.mrb[0].mxu0
        %v639 = vadd.f32 %v542, %v638
        %v640 = vpop.f32.mrb[0].mxu0
        %641 = vdwg.mxu0
        %v642 = vtanh.pop %v624
        %v643 = vtanh.pop %v629
        %v644 = vtanh.pop %v634
        %v645 = vtanh.pop %v639
        %v646 = vld [vmem:[%s5] sm:$0xff]
        %v647 = vld [vmem:[%s5 + $0x8] sm:$0xff]
        %v648 = vld [vmem:[%s5 + $0x10] sm:$0xff]
        %v649 = vld [vmem:[%s5 + $0x18] sm:$0xff]
        %v650 = vld [vmem:[%s6] sm:$0x1]
        %v652 = vlaneseq
        %v653 = vshrl.u32 %v652, 7
        %v654 = vsub.s32 0, %v653
        %v655 = vrot.slane %v650, %v654
        %v658 = vsel %vm544, %v642, 0
        %v661 = vsel %vm544, %v643, 0
        %v664 = vsel %vm544, %v644, 0
        %v667 = vsel %vm544, %v645, 0
        %669 = vmatprep.subr.mxu0 0.0
        %670 = vmatpush1.msra.mxu0 %v646
        %671 = vmatprep.subr.mxu0 0.0
        %672 = vmatpush1.msra.mxu0 %v647
        %673 = vmatprep.subr.mxu0 0.0
        %674 = vmatpush1.msra.mxu0 %v648
        %675 = vmatprep.subr.mxu0 0.0
        %676 = vmatpush1.msra.mxu0 %v649
        %677 = vmatprep.subr.mxu0 0.0
        %678 = vmatpush1.msra.mxu0 0.0
        %679 = vmatprep.subr.mxu0 0.0
        %680 = vmatpush1.msra.mxu0 0.0
        %681 = vmatprep.subr.mxu0 0.0
        %682 = vmatpush1.msra.mxu0 0.0
        %683 = vmatprep.subr.mxu0 0.0
        %684 = vmatpush1.msra.mxu0 0.0
        %685 = vmatprep.subr.mxu0 0.0
        %686 = vmatpush1.msra.mxu0 0.0
        %687 = vmatprep.subr.mxu0 0.0
        %688 = vmatpush1.msra.mxu0 0.0
        %689 = vmatprep.subr.mxu0 0.0
        %690 = vmatpush1.msra.mxu0 0.0
        %691 = vmatprep.subr.mxu0 0.0
        %692 = vmatpush1.msra.mxu0 0.0
        %693 = vmatprep.subr.mxu0 0.0
        %694 = vmatpush1.msra.mxu0 0.0
        %695 = vmatprep.subr.mxu0 0.0
        %696 = vmatpush1.msra.mxu0 0.0
        %697 = vmatprep.subr.mxu0 0.0
        %698 = vmatpush1.msra.mxu0 0.0
        %699 = vmatprep.subr.mxu0 0.0
        %700 = vmatpush1.msra.mxu0 0.0
        %701 = vmatprep.subr.mxu0 0.0
        %702 = vmatpush1.msra.mxu0 0.0
        %703 = vmatprep.subr.mxu0 0.0
        %704 = vmatpush1.msra.mxu0 0.0
        %705 = vmatprep.subr.mxu0 0.0
        %706 = vmatpush1.msra.mxu0 0.0
        %707 = vmatprep.subr.mxu0 0.0
        %708 = vmatpush1.msra.mxu0 0.0
        %709 = vmatprep.subr.mxu0 0.0
        %710 = vmatpush1.msra.mxu0 0.0
        %711 = vmatprep.subr.mxu0 0.0
        %712 = vmatpush1.msra.mxu0 0.0
        %713 = vmatprep.subr.mxu0 0.0
        %714 = vmatpush1.msra.mxu0 0.0
        %715 = vmatprep.subr.mxu0 0.0
        %716 = vmatpush1.msra.mxu0 0.0
        %717 = vmatprep.subr.mxu0 0.0
        %718 = vmatpush1.msra.mxu0 0.0
        %719 = vmatprep.subr.mxu0 0.0
        %720 = vmatpush1.msra.mxu0 0.0
        %721 = vmatprep.subr.mxu0 0.0
        %722 = vmatpush1.msra.mxu0 0.0
        %723 = vmatprep.subr.mxu0 0.0
        %724 = vmatpush1.msra.mxu0 0.0
        %725 = vmatprep.subr.mxu0 0.0
        %726 = vmatpush1.msra.mxu0 0.0
        %727 = vmatprep.subr.mxu0 0.0
        %728 = vmatpush1.msra.mxu0 0.0
        %729 = vmatprep.subr.mxu0 0.0
        %730 = vmatpush1.msra.mxu0 0.0
        %731 = vmatprep.subr.mxu0 0.0
        %732 = vmatpush1.msra.mxu0 0.0
        %733 = vmatprep.mubr.f32.mxu0 0.0
        %734 = vmatmul.mubr.f32.gmra.mrb[0].mxu0 %v658
        %v735 = vpop.f32.mrb[0].mxu0
        %v736 = vadd.f32 %v655, %v735
        %v737 = vpop.f32.mrb[0].mxu0
        %738 = vmatprep.mubr.f32.mxu0 0.0
        %739 = vmatmul.mubr.f32.gmra.mrb[0].mxu0 %v661
        %v740 = vpop.f32.mrb[0].mxu0
        %v741 = vadd.f32 %v655, %v740
        %v742 = vpop.f32.mrb[0].mxu0
        %743 = vmatprep.mubr.f32.mxu0 0.0
        %744 = vmatmul.mubr.f32.gmra.mrb[0].mxu0 %v664
        %v745 = vpop.f32.mrb[0].mxu0
        %v746 = vadd.f32 %v655, %v745
        %v747 = vpop.f32.mrb[0].mxu0
        %748 = vmatprep.mubr.f32.mxu0 0.0
        %749 = vmatmul.mubr.f32.gmra.mrb[0].mxu0 %v667
        %v750 = vpop.f32.mrb[0].mxu0
        %v751 = vadd.f32 %v655, %v750
        %v752 = vpop.f32.mrb[0].mxu0
        %753 = vdwg.mxu0
        %v754 = vtanh.pop %v736
        %v755 = vtanh.pop %v741
        %v756 = vtanh.pop %v746
        %v757 = vtanh.pop %v751
        %v758 = vld [vmem:[#allocation2] sm:$0xff]
        %v759 = vld [vmem:[#allocation2 + $0x8] sm:$0xff]
        %v760 = vld [vmem:[#allocation2 + $0x10] sm:$0xff]
        %v761 = vld [vmem:[#allocation2 + $0x18] sm:$0xff]
        %v762 = vld [vmem:[#allocation2 + $0x20] sm:$0xff]
        %v763 = vld [vmem:[#allocation2 + $0x28] sm:$0xff]
        %v764 = vld [vmem:[#allocation2 + $0x30] sm:$0xff]
        %v765 = vld [vmem:[#allocation2 + $0x38] sm:$0xff]
        %v766 = vld [vmem:[#allocation2 + $0x40] sm:$0xff]
        %v767 = vld [vmem:[#allocation2 + $0x48] sm:$0xff]
        %v768 = vld [vmem:[#allocation2 + $0x50] sm:$0xff]
        %v769 = vld [vmem:[#allocation2 + $0x58] sm:$0xff]
        %v770 = vld [vmem:[#allocation2 + $0x60] sm:$0xff]
        %v771 = vld [vmem:[#allocation2 + $0x68] sm:$0xff]
        %v772 = vld [vmem:[#allocation2 + $0x70] sm:$0xff]
        %v773 = vld [vmem:[#allocation2 + $0x78] sm:$0xff]
        %v774 = vld [vmem:[%s8] sm:$0x1]
        %v776 = vlaneseq
        %v777 = vshrl.u32 %v776, 7
        %v778 = vsub.s32 0, %v777
        %v779 = vrot.slane %v774, %v778
        %781 = vmatprep.subr.mxu0 0.0
        %782 = vmatpush1.msra.mxu0 %v758
        %783 = vmatprep.subr.mxu0 0.0
        %784 = vmatpush1.msra.mxu0 %v759
        %785 = vmatprep.subr.mxu0 0.0
        %786 = vmatpush1.msra.mxu0 %v760
        %787 = vmatprep.subr.mxu0 0.0
        %788 = vmatpush1.msra.mxu0 %v761
        %789 = vmatprep.subr.mxu0 0.0
        %790 = vmatpush1.msra.mxu0 %v762
        %791 = vmatprep.subr.mxu0 0.0
        %792 = vmatpush1.msra.mxu0 %v763
        %793 = vmatprep.subr.mxu0 0.0
        %794 = vmatpush1.msra.mxu0 %v764
        %795 = vmatprep.subr.mxu0 0.0
        %796 = vmatpush1.msra.mxu0 %v765
        %797 = vmatprep.subr.mxu0 0.0
        %798 = vmatpush1.msra.mxu0 %v766
        %799 = vmatprep.subr.mxu0 0.0
        %800 = vmatpush1.msra.mxu0 %v767
        %801 = vmatprep.subr.mxu0 0.0
        %802 = vmatpush1.msra.mxu0 %v768
        %803 = vmatprep.subr.mxu0 0.0
        %804 = vmatpush1.msra.mxu0 %v769
        %805 = vmatprep.subr.mxu0 0.0
        %806 = vmatpush1.msra.mxu0 %v770
        %807 = vmatprep.subr.mxu0 0.0
        %808 = vmatpush1.msra.mxu0 %v771
        %809 = vmatprep.subr.mxu0 0.0
        %810 = vmatpush1.msra.mxu0 %v772
        %811 = vmatprep.subr.mxu0 0.0
        %812 = vmatpush1.msra.mxu0 %v773
        %813 = vmatprep.subr.mxu0 0.0
        %814 = vmatpush1.msra.mxu0 0.0
        %815 = vmatprep.subr.mxu0 0.0
        %816 = vmatpush1.msra.mxu0 0.0
        %817 = vmatprep.subr.mxu0 0.0
        %818 = vmatpush1.msra.mxu0 0.0
        %819 = vmatprep.subr.mxu0 0.0
        %820 = vmatpush1.msra.mxu0 0.0
        %821 = vmatprep.subr.mxu0 0.0
        %822 = vmatpush1.msra.mxu0 0.0
        %823 = vmatprep.subr.mxu0 0.0
        %824 = vmatpush1.msra.mxu0 0.0
        %825 = vmatprep.subr.mxu0 0.0
        %826 = vmatpush1.msra.mxu0 0.0
        %827 = vmatprep.subr.mxu0 0.0
        %828 = vmatpush1.msra.mxu0 0.0
        %829 = vmatprep.subr.mxu0 0.0
        %830 = vmatpush1.msra.mxu0 0.0
        %831 = vmatprep.subr.mxu0 0.0
        %832 = vmatpush1.msra.mxu0 0.0
        %833 = vmatprep.subr.mxu0 0.0
        %834 = vmatpush1.msra.mxu0 0.0
        %835 = vmatprep.subr.mxu0 0.0
        %836 = vmatpush1.msra.mxu0 0.0
        %837 = vmatprep.subr.mxu0 0.0
        %838 = vmatpush1.msra.mxu0 0.0
        %839 = vmatprep.subr.mxu0 0.0
        %840 = vmatpush1.msra.mxu0 0.0
        %841 = vmatprep.subr.mxu0 0.0
        %842 = vmatpush1.msra.mxu0 0.0
        %843 = vmatprep.subr.mxu0 0.0
        %844 = vmatpush1.msra.mxu0 0.0
        %845 = vmatprep.mubr.f32.mxu0 0.0
        %846 = vmatmul.mubr.f32.gmra.mrb[0].mxu0 %v754
        %v847 = vpop.f32.mrb[0].mxu0
        %v848 = vadd.f32 %v779, %v847
        %v849 = vpop.f32.mrb[0].mxu0
        %850 = vmatprep.mubr.f32.mxu0 0.0
        %851 = vmatmul.mubr.f32.gmra.mrb[0].mxu0 %v755
        %v852 = vpop.f32.mrb[0].mxu0
        %v853 = vadd.f32 %v779, %v852
        %v854 = vpop.f32.mrb[0].mxu0
        %855 = vmatprep.mubr.f32.mxu0 0.0
        %856 = vmatmul.mubr.f32.gmra.mrb[0].mxu0 %v756
        %v857 = vpop.f32.mrb[0].mxu0
        %v858 = vadd.f32 %v779, %v857
        %v859 = vpop.f32.mrb[0].mxu0
        %860 = vmatprep.mubr.f32.mxu0 0.0
        %861 = vmatmul.mubr.f32.gmra.mrb[0].mxu0 %v757
        %v862 = vpop.f32.mrb[0].mxu0
        %v863 = vadd.f32 %v779, %v862
        %v864 = vpop.f32.mrb[0].mxu0
        %865 = vdwg.mxu0
        %v866 = vld [vmem:[%s10] sm:$0x1]
        %vm867 = vcmp.ne.f32.partialorder %v866, 0.0
        %v868 = vsel %vm867, 1, 0
        %v869 = vlaneseq
        %v870 = vshrl.u32 %v869, 7
        %v871 = vsub.s32 0, %v870
        %v872 = vrot.slane %v868, %v871
        %vm873 = vcmp.eq.s32.totalorder %v872, 1
        %v874 = vsel %vm873, %v848, -inf
        %v875 = vsel %vm873, %v853, -inf
        %v876 = vsel %vm873, %v858, -inf
        %v877 = vsel %vm873, %v863, -inf
        %878 = vmax.xlane.f32.xlu0 %v874
        %v879 = vpop.xlane.xlu0 %878
        %880 = vmax.xlane.f32.xlu0 %v875
        %v881 = vpop.xlane.xlu0 %880
        %882 = vmax.xlane.f32.xlu0 %v876
        %v883 = vpop.xlane.xlu0 %882
        %884 = vmax.xlane.f32.xlu0 %v877
        %v885 = vpop.xlane.xlu0 %884
        %v886 = vsub.f32 %v848, %v879
        %v887 = vsub.f32 %v853, %v881
        %v888 = vsub.f32 %v858, %v883
        %v889 = vsub.f32 %v863, %v885
        %v890 = vmul.f32 %v886, 1.442695
        %v891 = vpow.pop %v890
        %v892 = vmul.f32 %v887, 1.442695
        %v893 = vpow.pop %v892
        %v894 = vmul.f32 %v888, 1.442695
        %v895 = vpow.pop %v894
        %v896 = vmul.f32 %v889, 1.442695
        %v897 = vpow.pop %v896
        %v898 = vsel %vm873, %v891, 0.0
        %v899 = vsel %vm873, %v893, 0.0
        %v900 = vsel %vm873, %v895, 0.0
        %v901 = vsel %vm873, %v897, 0.0
        %v902 = vld [vmem:[#allocation5] sm:$0xff]
        %v903 = vld [vmem:[#allocation5 + $0x8] sm:$0xff]
        %v904 = vld [vmem:[#allocation5 + $0x10] sm:$0xff]
        %v905 = vld [vmem:[#allocation5 + $0x18] sm:$0xff]
        %v906 = vld [vmem:[#allocation5 + $0x20] sm:$0xff]
        %v907 = vld [vmem:[#allocation5 + $0x28] sm:$0xff]
        %v908 = vld [vmem:[#allocation5 + $0x30] sm:$0xff]
        %v909 = vld [vmem:[#allocation5 + $0x38] sm:$0xff]
        %v910 = vld [vmem:[#allocation5 + $0x40] sm:$0xff]
        %v911 = vld [vmem:[#allocation5 + $0x48] sm:$0xff]
        %v912 = vld [vmem:[#allocation5 + $0x50] sm:$0xff]
        %v913 = vld [vmem:[#allocation5 + $0x58] sm:$0xff]
        %v914 = vld [vmem:[#allocation5 + $0x60] sm:$0xff]
        %v915 = vld [vmem:[#allocation5 + $0x68] sm:$0xff]
        %v916 = vld [vmem:[#allocation5 + $0x70] sm:$0xff]
        %v917 = vld [vmem:[#allocation5 + $0x78] sm:$0xff]
        %918 = vmatprep.subr.mxu0 0.0
        %919 = vmatpush1.msra.mxu0 %v902
        %920 = vmatprep.subr.mxu0 0.0
        %921 = vmatpush1.msra.mxu0 %v903
        %922 = vmatprep.subr.mxu0 0.0
        %923 = vmatpush1.msra.mxu0 %v904
        %924 = vmatprep.subr.mxu0 0.0
        %925 = vmatpush1.msra.mxu0 %v905
        %926 = vmatprep.subr.mxu0 0.0
        %927 = vmatpush1.msra.mxu0 %v906
        %928 = vmatprep.subr.mxu0 0.0
        %929 = vmatpush1.msra.mxu0 %v907
        %930 = vmatprep.subr.mxu0 0.0
        %931 = vmatpush1.msra.mxu0 %v908
        %932 = vmatprep.subr.mxu0 0.0
        %933 = vmatpush1.msra.mxu0 %v909
        %934 = vmatprep.subr.mxu0 0.0
        %935 = vmatpush1.msra.mxu0 %v910
        %936 = vmatprep.subr.mxu0 0.0
        %937 = vmatpush1.msra.mxu0 %v911
        %938 = vmatprep.subr.mxu0 0.0
        %939 = vmatpush1.msra.mxu0 %v912
        %940 = vmatprep.subr.mxu0 0.0
        %941 = vmatpush1.msra.mxu0 %v913
        %942 = vmatprep.subr.mxu0 0.0
        %943 = vmatpush1.msra.mxu0 %v914
        %944 = vmatprep.subr.mxu0 0.0
        %945 = vmatpush1.msra.mxu0 %v915
        %946 = vmatprep.subr.mxu0 0.0
        %947 = vmatpush1.msra.mxu0 %v916
        %948 = vmatprep.subr.mxu0 0.0
        %949 = vmatpush1.msra.mxu0 %v917
        %950 = vmatprep.subr.mxu0 0.0
        %951 = vmatpush1.msra.mxu0 0.0
        %952 = vmatprep.subr.mxu0 0.0
        %953 = vmatpush1.msra.mxu0 0.0
        %954 = vmatprep.subr.mxu0 0.0
        %955 = vmatpush1.msra.mxu0 0.0
        %956 = vmatprep.subr.mxu0 0.0
        %957 = vmatpush1.msra.mxu0 0.0
        %958 = vmatprep.subr.mxu0 0.0
        %959 = vmatpush1.msra.mxu0 0.0
        %960 = vmatprep.subr.mxu0 0.0
        %961 = vmatpush1.msra.mxu0 0.0
        %962 = vmatprep.subr.mxu0 0.0
        %963 = vmatpush1.msra.mxu0 0.0
        %964 = vmatprep.subr.mxu0 0.0
        %965 = vmatpush1.msra.mxu0 0.0
        %966 = vmatprep.subr.mxu0 0.0
        %967 = vmatpush1.msra.mxu0 0.0
        %968 = vmatprep.subr.mxu0 0.0
        %969 = vmatpush1.msra.mxu0 0.0
        %970 = vmatprep.subr.mxu0 0.0
        %971 = vmatpush1.msra.mxu0 0.0
        %972 = vmatprep.subr.mxu0 0.0
        %973 = vmatpush1.msra.mxu0 0.0
        %974 = vmatprep.subr.mxu0 0.0
        %975 = vmatpush1.msra.mxu0 0.0
        %976 = vmatprep.subr.mxu0 0.0
        %977 = vmatpush1.msra.mxu0 0.0
        %978 = vmatprep.subr.mxu0 0.0
        %979 = vmatpush1.msra.mxu0 0.0
        %980 = vmatprep.subr.mxu0 0.0
        %981 = vmatpush1.msra.mxu0 0.0
        %982 = vmatprep.mubr.f32.mxu0 0.0
        %983 = vmatmul.mubr.f32.gmra.mrb[0].mxu0 %v898
        %v984 = vpop.f32.mrb[0].mxu0
        %v985 = vadd.f32 0.0, %v984
        %v986 = vpop.f32.mrb[0].mxu0
        %987 = vmatprep.mubr.f32.mxu0 0.0
        %988 = vmatmul.mubr.f32.gmra.mrb[0].mxu0 %v899
        %v989 = vpop.f32.mrb[0].mxu0
        %v990 = vadd.f32 0.0, %v989
        %v991 = vpop.f32.mrb[0].mxu0
        %992 = vmatprep.mubr.f32.mxu0 0.0
        %993 = vmatmul.mubr.f32.gmra.mrb[0].mxu0 %v900
        %v994 = vpop.f32.mrb[0].mxu0
        %v995 = vadd.f32 0.0, %v994
        %v996 = vpop.f32.mrb[0].mxu0
        %997 = vmatprep.mubr.f32.mxu0 0.0
        %998 = vmatmul.mubr.f32.gmra.mrb[0].mxu0 %v901
        %v999 = vpop.f32.mrb[0].mxu0
        %v1000 = vadd.f32 0.0, %v999
        %v1001 = vpop.f32.mrb[0].mxu0
        %1002 = vdwg.mxu0
        %v1003 = vsel %vm873, %v985, 1.0
        %v1004 = vsel %vm873, %v990, 1.0
        %v1005 = vsel %vm873, %v995, 1.0
        %v1006 = vsel %vm873, %v1000, 1.0
        %v1007 = vrcp.pop %v1003
        %v1008 = vmul.f32 %v898, %v1007
        %v1009 = vrcp.pop %v1004
        %v1010 = vmul.f32 %v899, %v1009
        %v1011 = vrcp.pop %v1005
        %v1012 = vmul.f32 %v900, %v1011
        %v1013 = vrcp.pop %v1006
        %v1014 = vmul.f32 %v901, %v1013
        %v1015 = vsel %vm873, %v1008, %v848
        %v1016 = vsel %vm873, %v1010, %v853
        %v1017 = vsel %vm873, %v1012, %v858
        %v1018 = vsel %vm873, %v1014, %v863
        %1019 = vst [vmem:[%s410] sm:$0xff] %v1015
        %1020 = vst [vmem:[%s410 + $0x8] sm:$0xff] %v1016
        %1021 = vst [vmem:[%s410 + $0x10] sm:$0xff] %v1017
        %1022 = vst [vmem:[%s410 + $0x18] sm:$0xff] %v1018
        %s1023 = sand.u32 %s271, 1
        %s1024 = scalar_lea.sflag [#allocation4], %s1023
        %s1025 = sand.u32 %s271, 1
        %s1026 = smul.addr %s1025, 32
        %s1027 = scalar_lea.vmem [#allocation7], %s1026
        // Predicated region
        $region73: #{tpu_custom_call.1} parent=63 // pred_check
          %p1028 = pneg %p281
        $region74: #{tpu_custom_call.1} parent=63 // pred_check_branch
          %1030 = sbr.rel (%p1028) target = $region76
        $region75: #{tpu_custom_call.1} parent=63 // pred_region
          %s1031 = smul.u32 4, %s27
          %s1033 = ssub.s32 512, 512
          %1034 = vsyncadd %s1024, %s1033
          %s1035 = smul.addr %s1031, 128
          %s1036 = scalar_lea.hbm %s11, %s1035
          %s1037 = sshll.u32 %s1027, 4
          %s1038 = int_to_ptr.vmem [resolvable:$true] %s1037
          %1043 = dma.vmem_to_hbm [thread:$0]  %s1038, 512, %s1036, %s1024, 128, 128, 8
        $region76: #{tpu_custom_call.1} parent=63 // pred_fallthru
          _
      $region64: #{tpu_custom_call.1} parent=5 // pred_fallthru
        _
      %p1044 = scmp.le.s32.totalorder 2, %s22
      // Predicated region
      $region77: #{tpu_custom_call.1} parent=5 // pred_check
        %p1045 = pneg %p1044
      $region78: #{tpu_custom_call.1} parent=5 // pred_check_branch
        %1047 = sbr.rel (%p1045) target = $region80
      $region79: #{tpu_custom_call.1} parent=5 // pred_region
        %s1048 = ssub.s32 %s22, 2
        // Predicated region
        $region81: #{tpu_custom_call.1} parent=79 // pred_check
          %p1049 = pneg %p287
        $region82: #{tpu_custom_call.1} parent=79 // pred_check_branch
          %1051 = sbr.rel (%p1049) target = $region84
        $region83: #{tpu_custom_call.1} parent=79 // pred_region
          %s1052 = sand.u32 %s272, 1
          %s1053 = scalar_lea.sflag [#allocation4], %s1052
          %s1054 = sand.u32 %s272, 1
          %s1055 = smul.addr %s1054, 32
          %s1056 = scalar_lea.vmem [#allocation7], %s1055
          %1057 = dma.done %s1053, 512
        $region84: #{tpu_custom_call.1} parent=79 // pred_fallthru
          _
      $region80: #{tpu_custom_call.1} parent=5 // pred_fallthru
        _
    $region6: #{tpu_custom_call.1} parent=1 // loop_footer
      %s26 = sadd.s32 1, %s22
    $region7: #{tpu_custom_call.1} parent=1 // loop_footer_branch
      %21 = sbr.rel target = $region3
    $region8: #{tpu_custom_call.1} parent=1 // loop_exit
      _
    %1058 = vsyncpa [#allocation3], 1
    %s1059 = scalar_lea.sflag [#allocation3], 1
    %1060 = vsyncpa %s1059, 1
    %1061 = vsyncpa [#allocation6], 1
    %1062 = vsyncpa [#allocation4], 1
    %s1063 = scalar_lea.sflag [#allocation4], 1
    %1064 = vsyncpa %s1063, 1

</llo_original>
